<compile_context>
chip_gen: v5e
topology: v5e:2x2
jax: 0.10.0
libtpu: 0.0.40
codegen_flags: <defaults>
</compile_context>

<pallas_src>
import functools

import jax
import jax.numpy as jnp
from jax.experimental import pallas as pl
from jax.experimental.pallas import tpu as pltpu

LANE = 128                 # TPU lane width
SUBLANE = 8                # TPU sublane width (f32)
_MIN_MEGACORE_ROWS = 512   # split single-tile batches >= this into 2 grid steps


def _round_up(x, m):
    return ((x + m - 1) // m) * m


def _choose_tile(B, block_b):
    """Pick a batch tile TB (multiple of 8) and the padded batch size."""
    block_b = max(SUBLANE, (block_b // SUBLANE) * SUBLANE)
    if B <= block_b:
        if B >= _MIN_MEGACORE_ROWS:
            # Split into two near-equal tiles so both v7x TensorCores get a
            # grid step (harmless single extra step on v5e/v6e).
            TB = _round_up(-(-B // 2), SUBLANE)
        else:
            TB = _round_up(B, SUBLANE)
    else:
        # Balance the tiles: minimal number of <=block_b tiles with
        # near-equal sizes, so batch padding is small (< 8 rows typically)
        # instead of up to a full tile.
        n = -(-B // block_b)
        TB = _round_up(-(-B // n), SUBLANE)
    grid = -(-B // TB)
    return TB, grid * TB


def _actor_kernel(x_ref, w_ref, b_ref, out_ref, *, S, S_pad, H, A):
    """One batch tile: log_softmax(relu(x@W1+b1) @ W2 + b2) over A actions."""
    wdt = w_ref.dtype
    x = x_ref[...]
    if x.dtype != wdt:
        x = x.astype(wdt)                      # in-VMEM cast (no host pass)

    # Static views into the packed buffers (aligned starts, zero-cost).
    w1 = w_ref[0:S, 0:H]                       # [S, H]
    w2 = w_ref[S_pad:S_pad + H, 0:A]           # [H, A]  (row S_pad is 16-aligned)
    b1 = b_ref[0:1, 0:H]                       # [1, H]  f32 (sublane row 0)
    b2 = b_ref[1:2, 0:A]                       # [1, A]  f32 (sublane row 1)

    # Hidden layer: MXU matmul in the weight dtype, f32 accumulation.
    h = jnp.dot(x, w1, preferred_element_type=jnp.float32) + b1
    h = jnp.maximum(h, 0.0)                    # f32 ReLU
    if h.dtype != wdt:
        h = h.astype(wdt)

    # Output layer: only the A real action columns are computed.
    logits = jnp.dot(h, w2, preferred_element_type=jnp.float32) + b2   # [TB, A]

    # Numerically stable log_softmax over the action axis, all in f32.
    m = jnp.max(logits, axis=-1, keepdims=True)
    shifted = logits - m
    lse = jnp.log(jnp.sum(jnp.exp(shifted), axis=-1, keepdims=True))
    out_ref[...] = (shifted - lse).astype(out_ref.dtype)


def pack_actor_params(w1, b1, w2, b2, *, use_bf16=True):
    """Pack layer weights/biases into two kernel-resident buffers.

    Call once per parameter update (NOT per forward): the packing scatter and
    the bf16 cast are hoisted out of the hot path.
    """
    S, H = w1.shape
    H2, A = w2.shape
    assert H2 == H and b1.shape == (H,) and b2.shape == (A,)

    wdt = jnp.bfloat16 if use_bf16 else jnp.float32
    S_pad = _round_up(S, 16)                   # bf16 sublane pack -> aligned w2 start
    W = _round_up(max(H, A), LANE)             # lane-padded common column width

    w_packed = jnp.zeros((S_pad + H, W), wdt)
    w_packed = w_packed.at[:S, :H].set(w1.astype(wdt))
    w_packed = w_packed.at[S_pad:S_pad + H, :A].set(w2.astype(wdt))

    # Biases live in two sublane rows (row indexing is layout-robust for any
    # hidden size, unlike lane-offset slicing).  Biases stay f32.
    b_packed = jnp.zeros((2, W), jnp.float32)
    b_packed = b_packed.at[0, :H].set(b1.astype(jnp.float32))
    b_packed = b_packed.at[1, :A].set(b2.astype(jnp.float32))

    return {"w": w_packed, "b": b_packed, "S": S, "S_pad": S_pad, "H": H, "A": A}


def actor_discrete_forward(state, params, *, block_b=4096):
    """state: [B, S] (f32 or bf16); params from pack_actor_params -> [B, A] f32 log-probs."""
    B, S = state.shape
    assert S == params["S"], "state feature dim mismatch"
    S_pad, H, A = params["S_pad"], params["H"], params["A"]
    w_packed, b_packed = params["w"], params["b"]

    TB, B_pad = _choose_tile(B, block_b)
    x = state
    if B_pad != B:
        # TODO(synk): a masked tail tile would avoid this extra pad pass;
        # padded zero rows stay finite and are sliced off below.
        x = jnp.pad(x, ((0, B_pad - B), (0, 0)))

    kernel = functools.partial(_actor_kernel, S=S, S_pad=S_pad, H=H, A=A)

    cost = pl.CostEstimate(
        flops=int(2 * B_pad * (S * H + H * A)),
        transcendentals=int(B_pad * (A + 1)),            # exp + log
        bytes_accessed=int(x.size * x.dtype.itemsize
                           + w_packed.size * w_packed.dtype.itemsize
                           + b_packed.size * b_packed.dtype.itemsize
                           + B_pad * A * 4),
    )

    out = pl.pallas_call(
        kernel,
        out_shape=jax.ShapeDtypeStruct((B_pad, A), jnp.float32),
        grid=(B_pad // TB,),
        in_specs=[
            pl.BlockSpec((TB, S), lambda i: (i, 0)),          # state tile
            pl.BlockSpec(w_packed.shape, lambda i: (0, 0)),   # resident packed weights
            pl.BlockSpec(b_packed.shape, lambda i: (0, 0)),   # resident packed biases
        ],
        out_specs=pl.BlockSpec((TB, A), lambda i: (i, 0)),    # final log-probs (no pad)
        compiler_params=pltpu.CompilerParams(
            dimension_semantics=("parallel",),                # 2x on v7x megacore
            vmem_limit_bytes=32 * 1024 * 1024,                # safe on v5e..v7x
        ),
        cost_estimate=cost,
    )(x, w_packed, b_packed)

    if B_pad != B:
        out = out[:B]
    return out


def init_linear_params(key, in_dim, out_dim):
    """PyTorch nn.Linear default init: U(-1/sqrt(in_dim), 1/sqrt(in_dim))."""
    kw, kb = jax.random.split(key)
    bound = 1.0 / (in_dim ** 0.5)
    w = jax.random.uniform(kw, (in_dim, out_dim), jnp.float32, -bound, bound)
    b = jax.random.uniform(kb, (out_dim,), jnp.float32, -bound, bound)
    return w, b


if __name__ == "__main__":
    # Module config: Actor_discrete(state_size=32, action_size=8, hidden=[128])
    batch = 8
    state_size = 32
    hidden = 128
    action_size = 8

    key = jax.random.PRNGKey(0)
    k_x, k_l1, k_l2, k_big = jax.random.split(key, 4)

    state = jax.random.normal(k_x, (batch, state_size), jnp.float32)
    w1, b1 = init_linear_params(k_l1, state_size, hidden)
    w2, b2 = init_linear_params(k_l2, hidden, action_size)

    def reference(x):
        h = jnp.maximum(x @ w1 + b1[None, :], 0.0)
        return jax.nn.log_softmax(h @ w2 + b2[None, :], axis=1)

    # f32 path (exact vs reference).
    params_f32 = pack_actor_params(w1, b1, w2, b2, use_bf16=False)
    log_probs = actor_discrete_forward(state, params_f32)
    jax.block_until_ready(log_probs)
    assert log_probs.shape == (batch, action_size)
    assert jnp.allclose(log_probs, reference(state), atol=1e-5), "f32 mismatch vs reference"

    # Default bf16-weight path on a ragged batch: exercises the tile split
    # (>=2 grid steps for megacore) and the batch-padding path.
    big_state = jax.random.normal(k_big, (1000, state_size), jnp.float32)
    params_bf16 = pack_actor_params(w1, b1, w2, b2)          # use_bf16=True default
    log_probs_big = actor_discrete_forward(big_state, params_bf16)
    jax.block_until_ready(log_probs_big)
    assert log_probs_big.shape == (1000, action_size)
    assert bool(jnp.all(jnp.isfinite(log_probs_big)))
    err = float(jnp.max(jnp.abs(log_probs_big - reference(big_state))))
    assert err < 0.1, f"bf16 path diverged: max err {err}"

    print("KERNEL_OK")
</pallas_src>

<mosaic_0001>
module attributes {stable_mosaic.version = 11 : i64} {
  func.func @_actor_kernel(%arg0: i32, %arg1: memref<8x32xf32, #tpu.memory_space<vmem>>, %arg2: memref<160x128xf32, #tpu.memory_space<vmem>>, %arg3: memref<2x128xf32, #tpu.memory_space<vmem>>, %arg4: memref<8x8xf32, #tpu.memory_space<vmem>>) attributes {dimension_semantics = [#tpu.dimension_semantics<parallel>], iteration_bounds = array<i64: 1>, scalar_prefetch = 0 : i64, scratch_operands = 0 : i64, tpu.core_type = #tpu.core_type<tc>, window_params = [{transform_indices = @transform_0, window_bounds = array<i64: 8, 32>}, {pipeline_mode = #tpu.pipeline_mode<synchronous>, transform_indices = @transform_1, window_bounds = array<i64: 160, 128>}, {pipeline_mode = #tpu.pipeline_mode<synchronous>, transform_indices = @transform_2, window_bounds = array<i64: 2, 128>}, {transform_indices = @transform_3, window_bounds = array<i64: 8, 8>}]} {
    %c0 = arith.constant 0 : index
    %c0_0 = arith.constant 0 : index
    %0 = vector.load %arg1[%c0, %c0_0] : memref<8x32xf32, #tpu.memory_space<vmem>>, vector<8x32xf32>
    %c0_1 = arith.constant 0 : index
    %c0_2 = arith.constant 0 : index
    %1 = vector.load %arg2[%c0_1, %c0_2] : memref<160x128xf32, #tpu.memory_space<vmem>>, vector<32x128xf32>
    %c32 = arith.constant 32 : index
    %c0_3 = arith.constant 0 : index
    %2 = vector.load %arg2[%c32, %c0_3] : memref<160x128xf32, #tpu.memory_space<vmem>>, vector<128x8xf32>
    %c0_4 = arith.constant 0 : index
    %c0_5 = arith.constant 0 : index
    %3 = vector.load %arg3[%c0_4, %c0_5] : memref<2x128xf32, #tpu.memory_space<vmem>>, vector<1x128xf32>
    %c1 = arith.constant 1 : index
    %c0_6 = arith.constant 0 : index
    %4 = vector.load %arg3[%c1, %c0_6] : memref<2x128xf32, #tpu.memory_space<vmem>>, vector<1x8xf32>
    %cst = arith.constant dense<0.000000e+00> : vector<8x128xf32>
    %5 = tpu.matmul %0, %1, %cst {dimension_numbers = #tpu.dot_dimension_numbers<[1], [0], [0], [1], [0, 0, 1, 1], [], []>} : vector<8x32xf32>, vector<32x128xf32>, vector<8x128xf32> -> vector<8x128xf32>
    %6 = vector.broadcast %3 : vector<1x128xf32> to vector<8x128xf32>
    %7 = arith.addf %5, %6 : vector<8x128xf32>
    %cst_7 = arith.constant 0.000000e+00 : f32
    %8 = vector.broadcast %cst_7 : f32 to vector<8x128xf32>
    %9 = arith.maximumf %7, %8 : vector<8x128xf32>
    %cst_8 = arith.constant dense<0.000000e+00> : vector<8x8xf32>
    %10 = tpu.matmul %9, %2, %cst_8 {dimension_numbers = #tpu.dot_dimension_numbers<[1], [0], [0], [1], [0, 0, 1, 1], [], []>} : vector<8x128xf32>, vector<128x8xf32>, vector<8x8xf32> -> vector<8x8xf32>
    %11 = vector.broadcast %4 : vector<1x8xf32> to vector<8x8xf32>
    %12 = arith.addf %10, %11 : vector<8x8xf32>
    %cst_9 = arith.constant dense<0xFF800000> : vector<8xf32>
    %13 = vector.multi_reduction <maximumf>, %12, %cst_9 [1] : vector<8x8xf32> to vector<8xf32>
    %14 = vector.shape_cast %13 : vector<8xf32> to vector<8x1xf32>
    %15 = vector.broadcast %14 : vector<8x1xf32> to vector<8x8xf32>
    %16 = arith.subf %12, %15 : vector<8x8xf32>
    %17 = math.exp %16 : vector<8x8xf32>
    %cst_10 = arith.constant dense<0.000000e+00> : vector<8xf32>
    %18 = vector.multi_reduction <add>, %17, %cst_10 [1] : vector<8x8xf32> to vector<8xf32>
    %19 = vector.shape_cast %18 : vector<8xf32> to vector<8x1xf32>
    %20 = math.log %19 : vector<8x1xf32>
    %21 = vector.broadcast %20 : vector<8x1xf32> to vector<8x8xf32>
    %22 = arith.subf %16, %21 : vector<8x8xf32>
    %c0_11 = arith.constant 0 : index
    %c0_12 = arith.constant 0 : index
    %23 = vector.load %arg4[%c0_11, %c0_12] : memref<8x8xf32, #tpu.memory_space<vmem>>, vector<8x8xf32>
    tpu.vector_store %arg4[%c0_11, %c0_12], %22 {strides = array<i32>} : memref<8x8xf32, #tpu.memory_space<vmem>>, vector<8x8xf32>,
    return
  }
  func.func @transform_0(%arg0: i32) -> (i32, i32) {
    %c0_i32 = arith.constant 0 : i32
    %c0_i32_0 = arith.constant 0 : i32
    return %arg0, %c0_i32 : i32, i32
  }
  func.func @transform_1(%arg0: i32) -> (i32, i32) {
    %c0_i32 = arith.constant 0 : i32
    %c0_i32_0 = arith.constant 0 : i32
    %c0_i32_1 = arith.constant 0 : i32
    return %c0_i32, %c0_i32_0 : i32, i32
  }
  func.func @transform_2(%arg0: i32) -> (i32, i32) {
    %c0_i32 = arith.constant 0 : i32
    %c0_i32_0 = arith.constant 0 : i32
    %c0_i32_1 = arith.constant 0 : i32
    return %c0_i32, %c0_i32_0 : i32, i32
  }
  func.func @transform_3(%arg0: i32) -> (i32, i32) {
    %c0_i32 = arith.constant 0 : i32
    %c0_i32_0 = arith.constant 0 : i32
    return %arg0, %c0_i32 : i32, i32
  }
}

</mosaic_0001>

<llo_original>
// kernel: tpu_custom_call.1
$region0: #{tpu_custom_call.1}
  #allocation0 [shape = 'u32[]', space=smem, size = 0x4, offset = 0x4, fixed_abs, tag = 'smem constant byte address 0x4 - core index']
  #allocation1 [shape = 'u32[72,128]{1,0:T(1,128)}', space=vmem, size = 0x9000, scoped, tag = 'internal scratch']
  %s0 = inlined_call_operand.hbm [shape: f32[8,32], index: 0, kind: input, shape index: {}]
  %s1 = inlined_call_operand.hbm [shape: f32[160,128], index: 1, kind: input, shape index: {}]
  %s2 = inlined_call_operand.hbm [shape: f32[2,128], index: 2, kind: input, shape index: {}]
  %s3 = inlined_call_operand.hbm [shape: f32[8,8], index: 3, kind: output, shape index: {}]
  %s4 = sld [smem:[#allocation0]]
  $region34: #{tpu_custom_call.1} parent=0
    _
  %s6 = ssub.s32 1, %s4
  %s7 = scalar_select 0, %s6, %s4
  $region1: #{tpu_custom_call.1} parent=0
    #allocation2 [shape = 'u8[4096]{0}', space=vmem, size = 0x1000, scoped, tag = 'input window, operand 0, single buffered']
    #allocation3 [shape = 's32[1]{0}', space=sflag, size = 0x4, scoped, tag = 'scoped memory for tpu_custom_call.1']
    #allocation4 [shape = 's32[1]{0}', space=sflag, size = 0x4, scoped, tag = 'scoped memory for tpu_custom_call.1']
    #allocation5 [shape = 'u8[81920]{0}', space=vmem, size = 0x14000, scoped, tag = 'input window, operand 1, single buffered']
    #allocation6 [shape = 's32[1]{0}', space=sflag, size = 0x4, scoped, tag = 'scoped memory for tpu_custom_call.1']
    #allocation7 [shape = 'u8[1024]{0}', space=vmem, size = 0x400, scoped, tag = 'input window, operand 2, single buffered']
    #allocation8 [shape = 'u8[4096]{0}', space=vmem, size = 0x1000, scoped, tag = 'output window, operand 0, single buffered']
    %8 = vsyncpa [#allocation3], 0
    %9 = vsyncpa [#allocation6], 0
    %10 = vsyncpa [#allocation4], 0
    // Predicated region
    $region2: #{tpu_custom_call.1} parent=1 // pred_check
      _
    $region3: #{tpu_custom_call.1} parent=1 // pred_check_branch
      %12 = sbr.rel (0) target = $region5
    $region4: #{tpu_custom_call.1} parent=1 // pred_region
      %14 = vsyncadd [#allocation3], 0
      %s16 = sshll.u32 %s0, 4
      %s17 = int_to_ptr.hbm [resolvable:$true] %s16
      %s18 = sshll.u32 [#allocation2], 4
      %s19 = int_to_ptr.vmem [resolvable:$true] %s18
      %21 = dma.hbm_to_vmem [thread:$0]  %s17, 128, %s19, [#allocation3]
    $region5: #{tpu_custom_call.1} parent=1 // pred_fallthru
      _
    // Predicated region
    $region6: #{tpu_custom_call.1} parent=1 // pred_check
      _
    $region7: #{tpu_custom_call.1} parent=1 // pred_check_branch
      %23 = sbr.rel (0) target = $region9
    $region8: #{tpu_custom_call.1} parent=1 // pred_region
      %25 = vsyncadd [#allocation6], 0
      %s26 = sshll.u32 %s1, 4
      %s27 = int_to_ptr.hbm [resolvable:$true] %s26
      %s28 = sshll.u32 [#allocation5], 4
      %s29 = int_to_ptr.vmem [resolvable:$true] %s28
      %34 = dma.hbm_to_vmem [thread:$0]  %s27, 2560, %s29, [#allocation6], 128, 128, 8
    $region9: #{tpu_custom_call.1} parent=1 // pred_fallthru
      _
    // Predicated region
    $region10: #{tpu_custom_call.1} parent=1 // pred_check
      _
    $region11: #{tpu_custom_call.1} parent=1 // pred_check_branch
      %36 = sbr.rel (0) target = $region13
    $region12: #{tpu_custom_call.1} parent=1 // pred_region
      %38 = vsyncadd [#allocation6], 0
      %s40 = sshll.u32 %s2, 4
      %s41 = int_to_ptr.hbm [resolvable:$true] %s40
      %s42 = sshll.u32 [#allocation7], 4
      %s43 = int_to_ptr.vmem [resolvable:$true] %s42
      %45 = dma.hbm_to_vmem [thread:$0]  %s41, 32, %s43, [#allocation6]
    $region13: #{tpu_custom_call.1} parent=1 // pred_fallthru
      _
    // Predicated region
    $region14: #{tpu_custom_call.1} parent=1 // pred_check
      _
    $region15: #{tpu_custom_call.1} parent=1 // pred_check_branch
      %47 = sbr.rel (0) target = $region17
    $region16: #{tpu_custom_call.1} parent=1 // pred_region
      %49 = dma.done [#allocation3], 128
    $region17: #{tpu_custom_call.1} parent=1 // pred_fallthru
      _
    // Predicated region
    $region18: #{tpu_custom_call.1} parent=1 // pred_check
      _
    $region19: #{tpu_custom_call.1} parent=1 // pred_check_branch
      %51 = sbr.rel (0) target = $region21
    $region20: #{tpu_custom_call.1} parent=1 // pred_region
      %53 = dma.done [#allocation6], 2560
    $region21: #{tpu_custom_call.1} parent=1 // pred_fallthru
      _
    // Predicated region
    $region22: #{tpu_custom_call.1} parent=1 // pred_check
      _
    $region23: #{tpu_custom_call.1} parent=1 // pred_check_branch
      %55 = sbr.rel (0) target = $region25
    $region24: #{tpu_custom_call.1} parent=1 // pred_region
      %57 = dma.done [#allocation6], 32
    $region25: #{tpu_custom_call.1} parent=1 // pred_fallthru
      _
    %v58 = vld [vmem:[#allocation2] sm:$0xff]
    %v59 = vld [vmem:[#allocation5] sm:$0xff]
    %v60 = vld [vmem:[#allocation5 + $0x8] sm:$0xff]
    %v61 = vld [vmem:[#allocation5 + $0x10] sm:$0xff]
    %v62 = vld [vmem:[#allocation5 + $0x18] sm:$0xff]
    %v63 = vld [vmem:[#allocation5 + $0x20] sm:$0xff]
    %v64 = vld [vmem:[#allocation5 + $0x28] sm:$0xff]
    %v65 = vld [vmem:[#allocation5 + $0x30] sm:$0xff]
    %v66 = vld [vmem:[#allocation5 + $0x38] sm:$0xff]
    %v67 = vld [vmem:[#allocation5 + $0x40] sm:$0xff]
    %v68 = vld [vmem:[#allocation5 + $0x48] sm:$0xff]
    %v69 = vld [vmem:[#allocation5 + $0x50] sm:$0xff]
    %v70 = vld [vmem:[#allocation5 + $0x58] sm:$0xff]
    %v71 = vld [vmem:[#allocation5 + $0x60] sm:$0xff]
    %v72 = vld [vmem:[#allocation5 + $0x68] sm:$0xff]
    %v73 = vld [vmem:[#allocation5 + $0x70] sm:$0xff]
    %v74 = vld [vmem:[#allocation5 + $0x78] sm:$0xff]
    %v75 = vld [vmem:[#allocation5 + $0x80] sm:$0xff]
    %v76 = vld [vmem:[#allocation5 + $0x88] sm:$0xff]
    %v77 = vld [vmem:[#allocation5 + $0x90] sm:$0xff]
    %v78 = vld [vmem:[#allocation5 + $0x98] sm:$0xff]
    %v79 = vld [vmem:[#allocation7] sm:$0x1]
    %v80 = vld [vmem:[#allocation7 + $0x1] sm:$0x1]
    %v81 = vperm.slane %v79, 0
    %vm82 = vcmask 261120
    %v84 = vsel %vm82, %v58, 0
    %86 = vmatpush.msra.mxu0 0.0
    %87 = vmatpush.msra.mxu0 0.0
    %88 = vmatpush.msra.mxu0 0.0
    %89 = vmatpush.msra.mxu0 0.0
    %90 = vmatpush.msra.mxu0 0.0
    %91 = vmatpush.msra.mxu0 0.0
    %92 = vmatpush.msra.mxu0 0.0
    %93 = vmatpush.msra.mxu0 0.0
    %94 = vmatpush.msra.mxu0 0.0
    %95 = vmatpush.msra.mxu0 0.0
    %96 = vmatpush.msra.mxu0 0.0
    %97 = vmatpush.msra.mxu0 0.0
    %98 = vmatpush.msra.mxu0 %v62
    %99 = vmatpush.msra.mxu0 %v61
    %100 = vmatpush.msra.mxu0 %v60
    %101 = vmatpush.msra.mxu0 %v59
    %102 = vmatmul.f32.gmra.mxu0 %v84
    %v103 = vpop.f32.mrf.mxu0
    %v104 = vadd.f32 %v81, %v103
    %105 = vdwg.mxu0
    %v106 = vmax.f32 %v104, 0.0
    %v107 = vperm.slane %v80, 0
    %108 = vmatpush.msra.mxu0 %v78
    %109 = vmatpush.msra.mxu0 %v77
    %110 = vmatpush.msra.mxu0 %v76
    %111 = vmatpush.msra.mxu0 %v75
    %112 = vmatpush.msra.mxu0 %v74
    %113 = vmatpush.msra.mxu0 %v73
    %114 = vmatpush.msra.mxu0 %v72
    %115 = vmatpush.msra.mxu0 %v71
    %116 = vmatpush.msra.mxu0 %v70
    %117 = vmatpush.msra.mxu0 %v69
    %118 = vmatpush.msra.mxu0 %v68
    %119 = vmatpush.msra.mxu0 %v67
    %120 = vmatpush.msra.mxu0 %v66
    %121 = vmatpush.msra.mxu0 %v65
    %122 = vmatpush.msra.mxu0 %v64
    %123 = vmatpush.msra.mxu0 %v63
    %124 = vmatmul.f32.gmra.mxu0 %v106
    %v125 = vpop.f32.mrf.mxu0
    %v126 = vadd.f32 %v107, %v125
    %127 = vdwg.mxu0
    %vm128 = vcmask 64512
    %v129 = vsel %vm128, %v126, -inf
    %130 = vmax.xlane.f32.xlu0 %v129
    %v131 = vpop.xlane.xlu0 %130
    %v132 = vsub.f32 %v126, %v131
    %v133 = vmul.f32 %v132, 1.442695
    %v134 = vpow.pop %v133
    %v135 = vsel %vm128, %v134, 0.0
    %136 = vadd.xlane.f32.xlu0 %v135
    %v137 = vpop.xlane.xlu0 %136
    %v138 = vlog2.pop %v137
    %v139 = vmul.f32 %v138, 0.6931472
    %v140 = vsub.f32 %v132, %v139
    %141 = vst.msk [vmem:[#allocation8] sm:$0xff] %vm128, %v140
    // Predicated region
    $region26: #{tpu_custom_call.1} parent=1 // pred_check
      _
    $region27: #{tpu_custom_call.1} parent=1 // pred_check_branch
      %143 = sbr.rel (0) target = $region29
    $region28: #{tpu_custom_call.1} parent=1 // pred_region
      %145 = vsyncadd [#allocation4], 0
      %s147 = sshll.u32 [#allocation8], 4
      %s148 = int_to_ptr.vmem [resolvable:$true] %s147
      %s149 = sshll.u32 %s3, 4
      %s150 = int_to_ptr.hbm [resolvable:$true] %s149
      %152 = dma.vmem_to_hbm [thread:$0]  %s148, 128, %s150, [#allocation4]
    $region29: #{tpu_custom_call.1} parent=1 // pred_fallthru
      _
    // Predicated region
    $region30: #{tpu_custom_call.1} parent=1 // pred_check
      _
    $region31: #{tpu_custom_call.1} parent=1 // pred_check_branch
      %154 = sbr.rel (0) target = $region33
    $region32: #{tpu_custom_call.1} parent=1 // pred_region
      %156 = dma.done [#allocation4], 128
    $region33: #{tpu_custom_call.1} parent=1 // pred_fallthru
      _
    %157 = vsyncpa [#allocation3], 1
    %158 = vsyncpa [#allocation6], 1
    %159 = vsyncpa [#allocation4], 1

</llo_original>
